<compile_context>
chip_gen: v7x
topology: tpu7x:2x2x1
jax: 0.10.0
libtpu: 0.0.40
codegen_flags: <defaults>
</compile_context>

<pallas_src>
import functools

import jax
import jax.numpy as jnp
from jax.experimental import pallas as pl
from jax.experimental.pallas import tpu as pltpu

_LANE = 128
_SUBLANE = 8


def _round_up(x: int, m: int) -> int:
    return ((x + m - 1) // m) * m


def _l1_partial_kernel(yp_ref, yt_ref, out_ref, *, tile_rows, total_rows, needs_mask):
    """Writes a (1, 128) lane-wise partial sum of |yp - yt| for this block."""
    # Subtract/abs in the native dtype; widen only for the accumulating sum.
    diff = jnp.abs(yp_ref[...] - yt_ref[...]).astype(jnp.float32)

    def _partial(d):
        # (tile_rows, 128) -> (tile_rows//8, 8, 128) is a sublane-aligned free
        # view; sum(axis=0) is pure VPU vreg adds.  The follow-up sublane sum
        # to (1, 128) uses the XLU slot, which is idle in this mem-bound
        # kernel.  The cross-lane reduce is deferred to the wrapper.
        p = d.reshape(tile_rows // _SUBLANE, _SUBLANE, _LANE).sum(axis=0)
        return p.sum(axis=0, keepdims=True)  # (1, 128)

    if needs_mask:
        i = pl.program_id(0)
        last = pl.num_programs(0) - 1

        @pl.when(i != last)
        def _():
            # Steady-state blocks: no mask work at all.
            out_ref[...] = _partial(diff)

        @pl.when(i == last)
        def _():
            # Only the last block can overhang the true row extent; discard
            # the stale-VMEM rows there.
            row_ids = i * tile_rows + jax.lax.broadcasted_iota(jnp.int32, diff.shape, 0)
            out_ref[...] = _partial(jnp.where(row_ids < total_rows, diff, 0.0))
    else:
        out_ref[...] = _partial(diff)


def my_loss(yp: jax.Array, yt: jax.Array, *, tile_bytes: int = 4 * 1024 * 1024) -> jax.Array:
    """L = sum(|yp - yt|), matching torch.sum(torch.abs(yp - yt))."""
    assert yp.shape == yt.shape, "yp and yt must have identical shapes"
    n_elems = yp.size
    assert n_elems > 0, "empty inputs are not supported"
    itemsize = yp.dtype.itemsize
    out_dtype = jnp.result_type(yp.dtype, yt.dtype)

    rows = pl.cdiv(n_elems, _LANE)

    def _as_slab(x):
        # reshape(-1) / reshape(rows, 128) of a contiguous array is layout
        # plumbing (bitcast).  The pad copy only happens when numel % 128 != 0.
        x = x.reshape(-1)
        pad = rows * _LANE - n_elems
        if pad:
            # TODO(synk): rare path (numel % 128 != 0) still materializes a
            # padded copy; avoiding it fully would need 1-D blocks / manual DMA.
            x = jnp.pad(x, (0, pad))
        return x.reshape(rows, _LANE)

    yp2 = _as_slab(yp)
    yt2 = _as_slab(yt)

    # Per-buffer byte budget -> row tile (8192 rows f32, 16384 rows bf16).
    max_tile_rows = max(_SUBLANE, (tile_bytes // (_LANE * itemsize)) // _SUBLANE * _SUBLANE)
    if rows <= max_tile_rows:
        tile_rows = _round_up(rows, _SUBLANE)
    else:
        nb = pl.cdiv(rows, max_tile_rows)
        nb += nb & 1  # even block count -> balanced split across v7x's 2 TCs
        tile_rows = _round_up(pl.cdiv(rows, nb), _SUBLANE)
    num_blocks = pl.cdiv(rows, tile_rows)
    needs_mask = (num_blocks * tile_rows) != rows

    kernel = functools.partial(
        _l1_partial_kernel,
        tile_rows=tile_rows,
        total_rows=rows,
        needs_mask=needs_mask,
    )

    bytes_accessed = 2 * rows * _LANE * itemsize + num_blocks * _LANE * 4

    partials = pl.pallas_call(
        kernel,
        out_shape=jax.ShapeDtypeStruct((num_blocks, _LANE), jnp.float32),
        grid_spec=pltpu.PrefetchScalarGridSpec(
            num_scalar_prefetch=0,
            grid=(num_blocks,),
            in_specs=[
                pl.BlockSpec((tile_rows, _LANE), lambda i: (i, 0)),
                pl.BlockSpec((tile_rows, _LANE), lambda i: (i, 0)),
            ],
            # Each block owns its own (1, 128) output row -> no carried state.
            out_specs=pl.BlockSpec((1, _LANE), lambda i: (i, 0)),
        ),
        compiler_params=pltpu.CompilerParams(
            # Independent blocks: lets Mosaic shard across both TensorCores on
            # v7x; no cost on single-TC v5e/v6e.
            dimension_semantics=("parallel",),
            # 16 MiB I/O buffering + f32 intermediates with generous headroom;
            # still < v7x's 64 MiB physical VMEM.
            vmem_limit_bytes=48 * 1024 * 1024,
        ),
        cost_estimate=pl.CostEstimate(
            flops=2 * n_elems,
            transcendentals=0,
            bytes_accessed=bytes_accessed,
        ),
    )(yp2, yt2)

    # Tiny final cross-lane reduce; cast back to input dtype for torch parity.
    return jnp.sum(partials).astype(out_dtype)


if __name__ == "__main__":
    key = jax.random.PRNGKey(0)
    k1, k2, k3, k4 = jax.random.split(key, 4)

    # Small NCHW-shaped example inputs (batch=2, channels=4, spatial=16).
    yp = jax.random.normal(k1, (2, 4, 16, 16), dtype=jnp.float32)
    yt = jax.random.normal(k2, (2, 4, 16, 16), dtype=jnp.float32)

    ref = jnp.sum(jnp.abs(yp - yt))

    # Default (single large block) path.
    loss = my_loss(yp, yt)
    jax.block_until_ready(loss)
    assert jnp.allclose(loss, ref, rtol=1e-5, atol=1e-5), (loss, ref)

    # Force the multi-block "parallel" path with a tiny tile budget.
    loss_mb = my_loss(yp, yt, tile_bytes=4096)
    jax.block_until_ready(loss_mb)
    assert jnp.allclose(loss_mb, ref, rtol=1e-5, atol=1e-5), (loss_mb, ref)

    # Odd-sized input: exercises the tail pad + gated last-block mask path.
    yp_odd = jax.random.normal(k3, (3, 5, 7, 11), dtype=jnp.float32)
    yt_odd = jax.random.normal(k4, (3, 5, 7, 11), dtype=jnp.float32)
    ref_odd = jnp.sum(jnp.abs(yp_odd - yt_odd))

    loss_odd = my_loss(yp_odd, yt_odd)
    jax.block_until_ready(loss_odd)
    assert jnp.allclose(loss_odd, ref_odd, rtol=1e-5, atol=1e-5), (loss_odd, ref_odd)

    # Odd size + multi-block + gated mask on the last block only.
    loss_odd_mb = my_loss(yp_odd, yt_odd, tile_bytes=4096)
    jax.block_until_ready(loss_odd_mb)
    assert jnp.allclose(loss_odd_mb, ref_odd, rtol=1e-5, atol=1e-5), (loss_odd_mb, ref_odd)

    print("KERNEL_OK")
</pallas_src>

<mosaic_0001>
module attributes {stable_mosaic.version = 11 : i64} {
  func.func @_l1_partial_kernel(%arg0: i32, %arg1: memref<16x128xf32, #tpu.memory_space<vmem>>, %arg2: memref<16x128xf32, #tpu.memory_space<vmem>>, %arg3: memref<1x128xf32, #tpu.memory_space<vmem>>) attributes {dimension_semantics = [#tpu.dimension_semantics<parallel>], iteration_bounds = array<i64: 1>, scalar_prefetch = 0 : i64, scratch_operands = 0 : i64, tpu.core_type = #tpu.core_type<tc>, window_params = [{transform_indices = @transform_0, window_bounds = array<i64: 16, 128>}, {transform_indices = @transform_1, window_bounds = array<i64: 16, 128>}, {transform_indices = @transform_2, window_bounds = array<i64: 1, 128>}]} {
    %c0 = arith.constant 0 : index
    %c0_0 = arith.constant 0 : index
    %0 = vector.load %arg1[%c0, %c0_0] : memref<16x128xf32, #tpu.memory_space<vmem>>, vector<16x128xf32>
    %c0_1 = arith.constant 0 : index
    %c0_2 = arith.constant 0 : index
    %1 = vector.load %arg2[%c0_1, %c0_2] : memref<16x128xf32, #tpu.memory_space<vmem>>, vector<16x128xf32>
    %2 = arith.subf %0, %1 : vector<16x128xf32>
    %3 = math.absf %2 : vector<16x128xf32>
    %4 = vector.shape_cast %3 : vector<16x128xf32> to vector<2x8x128xf32>
    %cst = arith.constant dense<0.000000e+00> : vector<8x128xf32>
    %5 = vector.multi_reduction <add>, %4, %cst [0] : vector<2x8x128xf32> to vector<8x128xf32>
    %cst_3 = arith.constant dense<0.000000e+00> : vector<128xf32>
    %6 = vector.multi_reduction <add>, %5, %cst_3 [0] : vector<8x128xf32> to vector<128xf32>
    %7 = vector.shape_cast %6 : vector<128xf32> to vector<1x128xf32>
    %c0_4 = arith.constant 0 : index
    %c0_5 = arith.constant 0 : index
    %8 = vector.load %arg3[%c0_4, %c0_5] : memref<1x128xf32, #tpu.memory_space<vmem>>, vector<1x128xf32>
    tpu.vector_store %arg3[%c0_4, %c0_5], %7 {strides = array<i32>} : memref<1x128xf32, #tpu.memory_space<vmem>>, vector<1x128xf32>,
    return
  }
  func.func @transform_0(%arg0: i32) -> (i32, i32) {
    %c0_i32 = arith.constant 0 : i32
    %c0_i32_0 = arith.constant 0 : i32
    return %arg0, %c0_i32 : i32, i32
  }
  func.func @transform_1(%arg0: i32) -> (i32, i32) {
    %c0_i32 = arith.constant 0 : i32
    %c0_i32_0 = arith.constant 0 : i32
    return %arg0, %c0_i32 : i32, i32
  }
  func.func @transform_2(%arg0: i32) -> (i32, i32) {
    %c0_i32 = arith.constant 0 : i32
    %c0_i32_0 = arith.constant 0 : i32
    return %arg0, %c0_i32 : i32, i32
  }
}

</mosaic_0001>

<llo_original>
// kernel: tpu_custom_call.1
$region0: #{tpu_custom_call.1}
  #allocation0 [shape = 'u32[]', space=smem, size = 0x4, offset = 0x4, fixed_abs, tag = 'smem constant byte address 0x4 - core index']
  #allocation1 [shape = 'u32[144,128]{1,0:T(1,128)}', space=vmem, size = 0x12000, scoped, tag = 'internal scratch']
  %s0 = inlined_call_operand.hbm [shape: f32[16,128], index: 0, kind: input, shape index: {}]
  %s1 = inlined_call_operand.hbm [shape: f32[16,128], index: 1, kind: input, shape index: {}]
  %s2 = inlined_call_operand.hbm [shape: f32[1,128], index: 2, kind: output, shape index: {}]
  %s3 = sld [smem:[#allocation0]]
  $region26: #{tpu_custom_call.1} parent=0
    _
  %s5 = ssub.s32 1, %s3
  %s6 = scalar_select 0, %s5, %s3
  $region1: #{tpu_custom_call.1} parent=0
    #allocation2 [shape = 'u8[8192]{0}', space=vmem, size = 0x2000, scoped, tag = 'input window, operand 0, single buffered']
    #allocation3 [shape = 's32[1]{0}', space=sflag, size = 0x4, scoped, tag = 'scoped memory for tpu_custom_call.1']
    #allocation4 [shape = 's32[1]{0}', space=sflag, size = 0x4, scoped, tag = 'scoped memory for tpu_custom_call.1']
    #allocation5 [shape = 'u8[8192]{0}', space=vmem, size = 0x2000, scoped, tag = 'input window, operand 1, single buffered']
    #allocation6 [shape = 's32[1]{0}', space=sflag, size = 0x4, scoped, tag = 'scoped memory for tpu_custom_call.1']
    #allocation7 [shape = 'u8[512]{0}', space=vmem, size = 0x400, scoped, tag = 'output window, operand 0, single buffered']
    %7 = vsyncpa [#allocation3], 0
    %8 = vsyncpa [#allocation6], 0
    %9 = vsyncpa [#allocation4], 0
    // Predicated region
    $region2: #{tpu_custom_call.1} parent=1 // pred_check
      _
    $region3: #{tpu_custom_call.1} parent=1 // pred_check_branch
      %11 = sbr.rel (0) target = $region5
    $region4: #{tpu_custom_call.1} parent=1 // pred_region
      %s13 = ssub.s32 256, 256
      %14 = vsyncadd [#allocation3], %s13
      %s15 = sshll.u32 [#allocation2], 4
      %s16 = int_to_ptr.vmem [resolvable:$true] %s15
      %21 = dma.hbm_to_vmem [thread:$0]  %s0, 256, %s16, [#allocation3], 128, 128, 8
    $region5: #{tpu_custom_call.1} parent=1 // pred_fallthru
      _
    // Predicated region
    $region6: #{tpu_custom_call.1} parent=1 // pred_check
      _
    $region7: #{tpu_custom_call.1} parent=1 // pred_check_branch
      %23 = sbr.rel (0) target = $region9
    $region8: #{tpu_custom_call.1} parent=1 // pred_region
      %s25 = ssub.s32 256, 256
      %26 = vsyncadd [#allocation6], %s25
      %s27 = sshll.u32 [#allocation5], 4
      %s28 = int_to_ptr.vmem [resolvable:$true] %s27
      %33 = dma.hbm_to_vmem [thread:$0]  %s1, 256, %s28, [#allocation6], 128, 128, 8
    $region9: #{tpu_custom_call.1} parent=1 // pred_fallthru
      _
    // Predicated region
    $region10: #{tpu_custom_call.1} parent=1 // pred_check
      _
    $region11: #{tpu_custom_call.1} parent=1 // pred_check_branch
      %35 = sbr.rel (0) target = $region13
    $region12: #{tpu_custom_call.1} parent=1 // pred_region
      %36 = dma.done [#allocation3], 256
    $region13: #{tpu_custom_call.1} parent=1 // pred_fallthru
      _
    // Predicated region
    $region14: #{tpu_custom_call.1} parent=1 // pred_check
      _
    $region15: #{tpu_custom_call.1} parent=1 // pred_check_branch
      %38 = sbr.rel (0) target = $region17
    $region16: #{tpu_custom_call.1} parent=1 // pred_region
      %39 = dma.done [#allocation6], 256
    $region17: #{tpu_custom_call.1} parent=1 // pred_fallthru
      _
    %v40 = vld [vmem:[#allocation2] sm:$0xff]
    %v41 = vld [vmem:[#allocation2 + $0x8] sm:$0xff]
    %v42 = vld [vmem:[#allocation5] sm:$0xff]
    %v43 = vld [vmem:[#allocation5 + $0x8] sm:$0xff]
    %v44 = vsub.f32 %v40, %v42
    %v45 = vsub.f32 %v41, %v43
    %v46 = vand.u32 2147483647, %v44
    %v47 = vand.u32 2147483647, %v45
    %v48 = vadd.f32 %v46, %v47
    %v49 = vrot.slane %v48, 4
    %v50 = vadd.f32 %v48, %v49
    %v51 = vrot.slane %v50, 2
    %v52 = vadd.f32 %v50, %v51
    %v53 = vrot.slane %v52, 1
    %v54 = vadd.f32 %v52, %v53
    %55 = vst [vmem:[#allocation7] sm:$0x1] %v54
    // Predicated region
    $region18: #{tpu_custom_call.1} parent=1 // pred_check
      _
    $region19: #{tpu_custom_call.1} parent=1 // pred_check_branch
      %57 = sbr.rel (0) target = $region21
    $region20: #{tpu_custom_call.1} parent=1 // pred_region
      %s59 = ssub.s32 16, 16
      %60 = vsyncadd [#allocation4], %s59
      %s62 = sshll.u32 [#allocation7], 4
      %s63 = int_to_ptr.vmem [resolvable:$true] %s62
      %65 = dma.vmem_to_hbm [thread:$0]  %s63, 16, %s2, [#allocation4]
    $region21: #{tpu_custom_call.1} parent=1 // pred_fallthru
      _
    // Predicated region
    $region22: #{tpu_custom_call.1} parent=1 // pred_check
      _
    $region23: #{tpu_custom_call.1} parent=1 // pred_check_branch
      %67 = sbr.rel (0) target = $region25
    $region24: #{tpu_custom_call.1} parent=1 // pred_region
      %68 = dma.done [#allocation4], 16
    $region25: #{tpu_custom_call.1} parent=1 // pred_fallthru
      _
    %69 = vsyncpa [#allocation3], 1
    %70 = vsyncpa [#allocation6], 1
    %71 = vsyncpa [#allocation4], 1

</llo_original>
